<compile_context>
chip_gen: v7x
topology: tpu7x:2x2x1
jax: 0.10.0
libtpu: 0.0.40
codegen_flags: <defaults>
</compile_context>

<pallas_src>
import jax
import jax.numpy as jnp
from jax.experimental import pallas as pl
from jax.experimental.pallas import tpu as pltpu


def _round_up(n: int, m: int) -> int:
    return (n + m - 1) // m * m


def unet1d_kernel(xc_ref, w1_ref, b1_ref, w2_ref, b2_ref, o_ref):
    # Layer 1: [x | emb] @ W1 + b1, ReLU.  bf16 operands, f32 accumulate.
    h = jnp.dot(xc_ref[...], w1_ref[...], preferred_element_type=jnp.float32)
    h = jnp.maximum(h + b1_ref[...], 0.0)

    # Layer 2: h @ W2 + b2, ReLU.  Re-cast the activation to bf16 for the MXU.
    h2 = jnp.dot(h.astype(w2_ref.dtype), w2_ref[...],
                 preferred_element_type=jnp.float32)
    h2 = jnp.maximum(h2 + b2_ref[...], 0.0)

    o_ref[...] = h2.astype(o_ref.dtype)


def unet1d_forward(x, emb, w1, b1, w2, b2, *, block_m=512,
                   compute_dtype=jnp.bfloat16):
    """x: [B, d_in], emb: [B, hidden] -> [B, hidden]  (f32 output).

    w1: [d_in + hidden, hidden], b1: [hidden]
    w2: [hidden, hidden],        b2: [hidden]
    Weights are stored [in_features, out_features] so the kernel does h @ W + b.
    """
    B, d_in = x.shape
    hidden = emb.shape[-1]
    assert w1.shape == (d_in + hidden, hidden)
    assert w2.shape == (hidden, hidden)

    K = d_in + hidden
    Kp = _round_up(K, 8)          # sublane-align the layer-1 contraction dim
    HP = _round_up(hidden, 128)   # lane-dense hidden/output dim (>=128 lanes)

    # Wrapper-side glue (tiny XLA copies): concat once, zero-pad, cast to bf16.
    xcat = jnp.concatenate([x, emb], axis=-1)
    xcat = jnp.pad(xcat, ((0, 0), (0, Kp - K))).astype(compute_dtype)
    w1p = jnp.pad(w1, ((0, Kp - K), (0, HP - hidden))).astype(compute_dtype)
    w2p = jnp.pad(w2, ((0, HP - hidden), (0, HP - hidden))).astype(compute_dtype)
    b1p = jnp.pad(b1, (0, HP - hidden)).reshape(1, HP).astype(jnp.float32)
    b2p = jnp.pad(b2, (0, HP - hidden)).reshape(1, HP).astype(jnp.float32)
    # Zero-padded W1/W2 columns + zero biases make all padded hidden/output
    # columns exactly 0, so slicing [:, :hidden] at the end is exact.

    # Batch grid: pipelined activation tiles; weights/biases stay VMEM-resident
    # (constant index_map).  BM rounded to a sublane multiple.
    BM = min(_round_up(B, 8), block_m)
    grid = (pl.cdiv(B, BM),)

    itemsize = jnp.dtype(compute_dtype).itemsize
    cost = pl.CostEstimate(
        flops=2 * B * Kp * HP + 2 * B * HP * HP,
        transcendentals=0,
        bytes_accessed=(B * Kp * itemsize          # xcat in
                        + Kp * HP * itemsize       # W1
                        + HP * HP * itemsize       # W2
                        + 2 * HP * 4               # biases
                        + B * HP * 4),             # output
    )

    out = pl.pallas_call(
        unet1d_kernel,
        out_shape=jax.ShapeDtypeStruct((B, HP), jnp.float32),
        grid=grid,
        in_specs=[
            pl.BlockSpec((BM, Kp), lambda i: (i, 0)),   # activations: tiled over batch
            pl.BlockSpec((Kp, HP), lambda i: (0, 0)),   # W1: resident
            pl.BlockSpec((1, HP), lambda i: (0, 0)),    # b1: resident
            pl.BlockSpec((HP, HP), lambda i: (0, 0)),   # W2: resident
            pl.BlockSpec((1, HP), lambda i: (0, 0)),    # b2: resident
        ],
        out_specs=pl.BlockSpec((BM, HP), lambda i: (i, 0)),
        compiler_params=pltpu.CompilerParams(
            dimension_semantics=("parallel",),
            # NOTE: for scaled-up hidden (2k-8k) set vmem_limit_bytes explicitly
            # and re-derive the weight-resident budget for v7x's 64 MiB VMEM.
        ),
        cost_estimate=cost,
    )(xcat, w1p, b1p, w2p, b2p)

    return out[:, :hidden]


def _ref_forward_bf16(x, emb, w1, b1, w2, b2):
    """Pure-JAX reference with the same bf16-operand / f32-accumulate recipe."""
    h = jnp.concatenate([x, emb], axis=-1).astype(jnp.bfloat16)
    h1 = jnp.maximum(
        jnp.dot(h, w1.astype(jnp.bfloat16), preferred_element_type=jnp.float32)
        + b1, 0.0)
    h2 = jnp.maximum(
        jnp.dot(h1.astype(jnp.bfloat16), w2.astype(jnp.bfloat16),
                preferred_element_type=jnp.float32) + b2, 0.0)
    return h2


def _torch_linear_init(key, fan_in, fan_out):
    """PyTorch nn.Linear init: U(-1/sqrt(fan_in), 1/sqrt(fan_in)).

    Weight returned as [fan_in, fan_out] (already transposed for h @ W).
    """
    kw, kb = jax.random.split(key)
    bound = 1.0 / (fan_in ** 0.5)
    w = jax.random.uniform(kw, (fan_in, fan_out), jnp.float32, -bound, bound)
    b = jax.random.uniform(kb, (fan_out,), jnp.float32, -bound, bound)
    return w, b


if __name__ == "__main__":
    B, d_in, hidden = 8, 4, 32

    key = jax.random.PRNGKey(0)
    kx, kemb, k1, k2 = jax.random.split(key, 4)

    x = jax.random.normal(kx, (B, d_in), jnp.float32)
    emb = jax.random.normal(kemb, (B, hidden), jnp.float32)

    w1, b1 = _torch_linear_init(k1, d_in + hidden, hidden)
    w2, b2 = _torch_linear_init(k2, hidden, hidden)

    out = unet1d_forward(x, emb, w1, b1, w2, b2)
    jax.block_until_ready(out)
    assert out.shape == (B, hidden)

    # Strict check against a bf16/f32-accumulate reference (same numerics).
    ref_bf16 = _ref_forward_bf16(x, emb, w1, b1, w2, b2)
    assert jnp.allclose(out, ref_bf16, atol=1e-3, rtol=1e-3)

    # Loose check against the original full-f32 PyTorch semantics.
    h_ref = jnp.concatenate([x, emb], axis=-1)
    h_ref = jnp.maximum(h_ref @ w1 + b1, 0.0)
    h_ref = jnp.maximum(h_ref @ w2 + b2, 0.0)
    assert jnp.allclose(out, h_ref, atol=5e-2, rtol=5e-2)

    print("KERNEL_OK")
</pallas_src>

<mosaic_0001>
module attributes {stable_mosaic.version = 11 : i64} {
  func.func @unet1d_kernel(%arg0: i32, %arg1: memref<8x40xbf16, #tpu.memory_space<vmem>>, %arg2: memref<40x128xbf16, #tpu.memory_space<vmem>>, %arg3: memref<1x128xf32, #tpu.memory_space<vmem>>, %arg4: memref<128x128xbf16, #tpu.memory_space<vmem>>, %arg5: memref<1x128xf32, #tpu.memory_space<vmem>>, %arg6: memref<8x128xf32, #tpu.memory_space<vmem>>) attributes {dimension_semantics = [#tpu.dimension_semantics<parallel>], iteration_bounds = array<i64: 1>, scalar_prefetch = 0 : i64, scratch_operands = 0 : i64, tpu.core_type = #tpu.core_type<tc>, window_params = [{transform_indices = @transform_0, window_bounds = array<i64: 8, 40>}, {pipeline_mode = #tpu.pipeline_mode<synchronous>, transform_indices = @transform_1, window_bounds = array<i64: 40, 128>}, {pipeline_mode = #tpu.pipeline_mode<synchronous>, transform_indices = @transform_2, window_bounds = array<i64: 1, 128>}, {pipeline_mode = #tpu.pipeline_mode<synchronous>, transform_indices = @transform_3, window_bounds = array<i64: 128, 128>}, {pipeline_mode = #tpu.pipeline_mode<synchronous>, transform_indices = @transform_4, window_bounds = array<i64: 1, 128>}, {transform_indices = @transform_5, window_bounds = array<i64: 8, 128>}]} {
    %c0 = arith.constant 0 : index
    %c0_0 = arith.constant 0 : index
    %0 = vector.load %arg1[%c0, %c0_0] : memref<8x40xbf16, #tpu.memory_space<vmem>>, vector<8x40xbf16>
    %c0_1 = arith.constant 0 : index
    %c0_2 = arith.constant 0 : index
    %1 = vector.load %arg2[%c0_1, %c0_2] : memref<40x128xbf16, #tpu.memory_space<vmem>>, vector<40x128xbf16>
    %cst = arith.constant dense<0.000000e+00> : vector<8x128xf32>
    %2 = tpu.matmul %0, %1, %cst {dimension_numbers = #tpu.dot_dimension_numbers<[1], [0], [0], [1], [0, 0, 1, 1], [], []>} : vector<8x40xbf16>, vector<40x128xbf16>, vector<8x128xf32> -> vector<8x128xf32>
    %c0_3 = arith.constant 0 : index
    %c0_4 = arith.constant 0 : index
    %3 = vector.load %arg3[%c0_3, %c0_4] : memref<1x128xf32, #tpu.memory_space<vmem>>, vector<1x128xf32>
    %4 = vector.broadcast %3 : vector<1x128xf32> to vector<8x128xf32>
    %5 = arith.addf %2, %4 : vector<8x128xf32>
    %cst_5 = arith.constant 0.000000e+00 : f32
    %6 = vector.broadcast %cst_5 : f32 to vector<8x128xf32>
    %7 = arith.maximumf %5, %6 : vector<8x128xf32>
    %8 = arith.truncf %7 : vector<8x128xf32> to vector<8x128xbf16>
    %c0_6 = arith.constant 0 : index
    %c0_7 = arith.constant 0 : index
    %9 = vector.load %arg4[%c0_6, %c0_7] : memref<128x128xbf16, #tpu.memory_space<vmem>>, vector<128x128xbf16>
    %cst_8 = arith.constant dense<0.000000e+00> : vector<8x128xf32>
    %10 = tpu.matmul %8, %9, %cst_8 {dimension_numbers = #tpu.dot_dimension_numbers<[1], [0], [0], [1], [0, 0, 1, 1], [], []>} : vector<8x128xbf16>, vector<128x128xbf16>, vector<8x128xf32> -> vector<8x128xf32>
    %c0_9 = arith.constant 0 : index
    %c0_10 = arith.constant 0 : index
    %11 = vector.load %arg5[%c0_9, %c0_10] : memref<1x128xf32, #tpu.memory_space<vmem>>, vector<1x128xf32>
    %12 = vector.broadcast %11 : vector<1x128xf32> to vector<8x128xf32>
    %13 = arith.addf %10, %12 : vector<8x128xf32>
    %cst_11 = arith.constant 0.000000e+00 : f32
    %14 = vector.broadcast %cst_11 : f32 to vector<8x128xf32>
    %15 = arith.maximumf %13, %14 : vector<8x128xf32>
    %c0_12 = arith.constant 0 : index
    %c0_13 = arith.constant 0 : index
    %16 = vector.load %arg6[%c0_12, %c0_13] : memref<8x128xf32, #tpu.memory_space<vmem>>, vector<8x128xf32>
    tpu.vector_store %arg6[%c0_12, %c0_13], %15 {strides = array<i32>} : memref<8x128xf32, #tpu.memory_space<vmem>>, vector<8x128xf32>,
    return
  }
  func.func @transform_0(%arg0: i32) -> (i32, i32) {
    %c0_i32 = arith.constant 0 : i32
    %c0_i32_0 = arith.constant 0 : i32
    return %arg0, %c0_i32 : i32, i32
  }
  func.func @transform_1(%arg0: i32) -> (i32, i32) {
    %c0_i32 = arith.constant 0 : i32
    %c0_i32_0 = arith.constant 0 : i32
    %c0_i32_1 = arith.constant 0 : i32
    return %c0_i32, %c0_i32_0 : i32, i32
  }
  func.func @transform_2(%arg0: i32) -> (i32, i32) {
    %c0_i32 = arith.constant 0 : i32
    %c0_i32_0 = arith.constant 0 : i32
    %c0_i32_1 = arith.constant 0 : i32
    return %c0_i32, %c0_i32_0 : i32, i32
  }
  func.func @transform_3(%arg0: i32) -> (i32, i32) {
    %c0_i32 = arith.constant 0 : i32
    %c0_i32_0 = arith.constant 0 : i32
    %c0_i32_1 = arith.constant 0 : i32
    return %c0_i32, %c0_i32_0 : i32, i32
  }
  func.func @transform_4(%arg0: i32) -> (i32, i32) {
    %c0_i32 = arith.constant 0 : i32
    %c0_i32_0 = arith.constant 0 : i32
    %c0_i32_1 = arith.constant 0 : i32
    return %c0_i32, %c0_i32_0 : i32, i32
  }
  func.func @transform_5(%arg0: i32) -> (i32, i32) {
    %c0_i32 = arith.constant 0 : i32
    %c0_i32_0 = arith.constant 0 : i32
    return %arg0, %c0_i32 : i32, i32
  }
}

</mosaic_0001>

<llo_original>
// kernel: tpu_custom_call.1
$region0: #{tpu_custom_call.1}
  #allocation0 [shape = 'u32[]', space=smem, size = 0x4, offset = 0x4, fixed_abs, tag = 'smem constant byte address 0x4 - core index']
  #allocation1 [shape = 'u32[144,128]{1,0:T(1,128)}', space=vmem, size = 0x12000, scoped, tag = 'internal scratch']
  %s0 = inlined_call_operand.hbm [shape: bf16[8,40], index: 0, kind: input, shape index: {}]
  %s1 = inlined_call_operand.hbm [shape: bf16[40,128], index: 1, kind: input, shape index: {}]
  %s2 = inlined_call_operand.vmem [shape: f32[1,128], index: 2, kind: input, shape index: {}]
  %s3 = inlined_call_operand.hbm [shape: bf16[128,128], index: 3, kind: input, shape index: {}]
  %s4 = inlined_call_operand.vmem [shape: f32[1,128], index: 4, kind: input, shape index: {}]
  %s5 = inlined_call_operand.hbm [shape: f32[8,128], index: 5, kind: output, shape index: {}]
  %s6 = sld [smem:[#allocation0]]
  $region42: #{tpu_custom_call.1} parent=0
    _
  %s8 = ssub.s32 1, %s6
  %s9 = scalar_select 0, %s8, %s6
  $region1: #{tpu_custom_call.1} parent=0
    #allocation2 [shape = 'u8[2048]{0}', space=vmem, size = 0x800, scoped, tag = 'input window, operand 0, single buffered']
    #allocation3 [shape = 's32[1]{0}', space=sflag, size = 0x4, scoped, tag = 'scoped memory for tpu_custom_call.1']
    #allocation4 [shape = 's32[1]{0}', space=sflag, size = 0x4, scoped, tag = 'scoped memory for tpu_custom_call.1']
    #allocation5 [shape = 'u8[10240]{0}', space=vmem, size = 0x2800, scoped, tag = 'input window, operand 1, single buffered']
    #allocation6 [shape = 's32[1]{0}', space=sflag, size = 0x4, scoped, tag = 'scoped memory for tpu_custom_call.1']
    #allocation7 [shape = 'u8[32768]{0}', space=vmem, size = 0x8000, scoped, tag = 'input window, operand 3, single buffered']
    #allocation8 [shape = 'u8[4096]{0}', space=vmem, size = 0x1000, scoped, tag = 'output window, operand 0, single buffered']
    %10 = vsyncpa [#allocation3], 0
    %11 = vsyncpa [#allocation6], 0
    %12 = vsyncpa [#allocation4], 0
    // Predicated region
    $region2: #{tpu_custom_call.1} parent=1 // pred_check
      _
    $region3: #{tpu_custom_call.1} parent=1 // pred_check_branch
      %14 = sbr.rel (0) target = $region5
    $region4: #{tpu_custom_call.1} parent=1 // pred_region
      %s16 = ssub.s32 64, 64
      %17 = vsyncadd [#allocation3], %s16
      %s19 = sshll.u32 [#allocation2], 4
      %s20 = int_to_ptr.vmem [resolvable:$true] %s19
      %22 = dma.hbm_to_vmem [thread:$0]  %s0, 64, %s20, [#allocation3]
    $region5: #{tpu_custom_call.1} parent=1 // pred_fallthru
      _
    // Predicated region
    $region6: #{tpu_custom_call.1} parent=1 // pred_check
      _
    $region7: #{tpu_custom_call.1} parent=1 // pred_check_branch
      %24 = sbr.rel (0) target = $region9
    $region8: #{tpu_custom_call.1} parent=1 // pred_region
      %s26 = ssub.s32 320, 320
      %27 = vsyncadd [#allocation6], %s26
      %s28 = sshll.u32 [#allocation5], 4
      %s29 = int_to_ptr.vmem [resolvable:$true] %s28
      %34 = dma.hbm_to_vmem [thread:$0]  %s1, 320, %s29, [#allocation6], 64, 64, 4
    $region9: #{tpu_custom_call.1} parent=1 // pred_fallthru
      _
    // Predicated region
    $region10: #{tpu_custom_call.1} parent=1 // pred_check
      _
    $region11: #{tpu_custom_call.1} parent=1 // pred_check_branch
      %36 = sbr.rel (0) target = $region13
    $region12: #{tpu_custom_call.1} parent=1 // pred_region
      _
    $region13: #{tpu_custom_call.1} parent=1 // pred_fallthru
      _
    // Predicated region
    $region14: #{tpu_custom_call.1} parent=1 // pred_check
      _
    $region15: #{tpu_custom_call.1} parent=1 // pred_check_branch
      %38 = sbr.rel (0) target = $region17
    $region16: #{tpu_custom_call.1} parent=1 // pred_region
      %s40 = ssub.s32 1024, 1024
      %41 = vsyncadd [#allocation6], %s40
      %s42 = sshll.u32 [#allocation7], 4
      %s43 = int_to_ptr.vmem [resolvable:$true] %s42
      %48 = dma.hbm_to_vmem [thread:$0]  %s3, 1024, %s43, [#allocation6], 64, 64, 4
    $region17: #{tpu_custom_call.1} parent=1 // pred_fallthru
      _
    // Predicated region
    $region18: #{tpu_custom_call.1} parent=1 // pred_check
      _
    $region19: #{tpu_custom_call.1} parent=1 // pred_check_branch
      %50 = sbr.rel (0) target = $region21
    $region20: #{tpu_custom_call.1} parent=1 // pred_region
      _
    $region21: #{tpu_custom_call.1} parent=1 // pred_fallthru
      _
    // Predicated region
    $region22: #{tpu_custom_call.1} parent=1 // pred_check
      _
    $region23: #{tpu_custom_call.1} parent=1 // pred_check_branch
      %52 = sbr.rel (0) target = $region25
    $region24: #{tpu_custom_call.1} parent=1 // pred_region
      %53 = dma.done [#allocation3], 64
    $region25: #{tpu_custom_call.1} parent=1 // pred_fallthru
      _
    // Predicated region
    $region26: #{tpu_custom_call.1} parent=1 // pred_check
      _
    $region27: #{tpu_custom_call.1} parent=1 // pred_check_branch
      %55 = sbr.rel (0) target = $region29
    $region28: #{tpu_custom_call.1} parent=1 // pred_region
      %56 = dma.done [#allocation6], 320
    $region29: #{tpu_custom_call.1} parent=1 // pred_fallthru
      _
    // Predicated region
    $region30: #{tpu_custom_call.1} parent=1 // pred_check
      _
    $region31: #{tpu_custom_call.1} parent=1 // pred_check_branch
      %58 = sbr.rel (0) target = $region33
    $region32: #{tpu_custom_call.1} parent=1 // pred_region
      %59 = dma.done [#allocation6], 1024
    $region33: #{tpu_custom_call.1} parent=1 // pred_fallthru
      _
    %v61 = vld [vmem:[#allocation2] sm:$0xf]
    %v62 = vld [vmem:[#allocation5] sm:$0xf]
    %v63 = vld [vmem:[#allocation5 + $0x4] sm:$0xf]
    %v64 = vld [vmem:[#allocation5 + $0x8] sm:$0xf]
    %v65 = vld [vmem:[#allocation5 + $0xc] sm:$0xf]
    %v66 = vld [vmem:[#allocation5 + $0x10] sm:$0xf]
    %v67 = vld [vmem:[%s2] sm:$0x1]
    %v69 = vlaneseq
    %v70 = vshrl.u32 %v69, 7
    %v71 = vsub.s32 0, %v70
    %v72 = vrot.slane %v67, %v71
    %v79 = vunpack.c.l.b16 %v62
    %v80 = vunpack.c.l.b16 %v63
    %v81 = vunpack.c.l.b16 %v64
    %v82 = vunpack.c.l.b16 %v65
    %v83 = vunpack.c.l.b16 %v66
    %v84 = vpack.c.b16 %v80, %v79
    %v85 = vpack.c.b16 %v82, %v81
    %v86 = vpack.c.b16 %v83, %v83
    %vm89 = vcmask 326656
    %v91 = vsel %vm89, %v61, 0
    %vm93 = vcmask 1043456
    %v95 = vsel %vm93, %v86, 0
    %97 = vmatprep.subr.bf16.mxu0 0
    %98 = vmatpush1.bf16.msra.mxu0 %v84
    %99 = vmatprep.subr.bf16.mxu0 0
    %100 = vmatpush1.bf16.msra.mxu0 %v85
    %101 = vmatprep.subr.bf16.mxu0 0
    %102 = vmatpush1.bf16.msra.mxu0 %v95
    %103 = vmatprep.subr.bf16.mxu0 0
    %104 = vmatpush1.bf16.msra.mxu0 0
    %105 = vmatprep.subr.bf16.mxu0 0
    %106 = vmatpush1.bf16.msra.mxu0 0
    %107 = vmatprep.subr.bf16.mxu0 0
    %108 = vmatpush1.bf16.msra.mxu0 0
    %109 = vmatprep.subr.bf16.mxu0 0
    %110 = vmatpush1.bf16.msra.mxu0 0
    %111 = vmatprep.subr.bf16.mxu0 0
    %112 = vmatpush1.bf16.msra.mxu0 0
    %113 = vmatprep.subr.bf16.mxu0 0
    %114 = vmatpush1.bf16.msra.mxu0 0
    %115 = vmatprep.subr.bf16.mxu0 0
    %116 = vmatpush1.bf16.msra.mxu0 0
    %117 = vmatprep.subr.bf16.mxu0 0
    %118 = vmatpush1.bf16.msra.mxu0 0
    %119 = vmatprep.subr.bf16.mxu0 0
    %120 = vmatpush1.bf16.msra.mxu0 0
    %121 = vmatprep.subr.bf16.mxu0 0
    %122 = vmatpush1.bf16.msra.mxu0 0
    %123 = vmatprep.subr.bf16.mxu0 0
    %124 = vmatpush1.bf16.msra.mxu0 0
    %125 = vmatprep.subr.bf16.mxu0 0
    %126 = vmatpush1.bf16.msra.mxu0 0
    %127 = vmatprep.subr.bf16.mxu0 0
    %128 = vmatpush1.bf16.msra.mxu0 0
    %129 = vmatprep.mubr.bf16.mxu0 0
    %130 = vmatmul.mubr.bf16.gmra.mrb[0].mxu0 %v91
    %v131 = vpop.f32.mrb[0].mxu0
    %v132 = vadd.f32 %v72, %v131
    %v133 = vpop.f32.mrb[0].mxu0
    %v134 = vpop.f32.mrb[0].mxu0
    %v135 = vpop.f32.mrb[0].mxu0
    %136 = vdwg.mxu0
    %v137 = vmax.f32 %v132, 0.0
    %v138 = vpack.c.bf16 %v137, %v137
    %v139 = vld [vmem:[#allocation7] sm:$0xf]
    %v140 = vld [vmem:[#allocation7 + $0x4] sm:$0xf]
    %v141 = vld [vmem:[#allocation7 + $0x8] sm:$0xf]
    %v142 = vld [vmem:[#allocation7 + $0xc] sm:$0xf]
    %v143 = vld [vmem:[#allocation7 + $0x10] sm:$0xf]
    %v144 = vld [vmem:[#allocation7 + $0x14] sm:$0xf]
    %v145 = vld [vmem:[#allocation7 + $0x18] sm:$0xf]
    %v146 = vld [vmem:[#allocation7 + $0x1c] sm:$0xf]
    %v147 = vld [vmem:[#allocation7 + $0x20] sm:$0xf]
    %v148 = vld [vmem:[#allocation7 + $0x24] sm:$0xf]
    %v149 = vld [vmem:[#allocation7 + $0x28] sm:$0xf]
    %v150 = vld [vmem:[#allocation7 + $0x2c] sm:$0xf]
    %v151 = vld [vmem:[#allocation7 + $0x30] sm:$0xf]
    %v152 = vld [vmem:[#allocation7 + $0x34] sm:$0xf]
    %v153 = vld [vmem:[#allocation7 + $0x38] sm:$0xf]
    %v154 = vld [vmem:[#allocation7 + $0x3c] sm:$0xf]
    %v155 = vld [vmem:[%s4] sm:$0x1]
    %v157 = vlaneseq
    %v158 = vshrl.u32 %v157, 7
    %v159 = vsub.s32 0, %v158
    %v160 = vrot.slane %v155, %v159
    %v178 = vunpack.c.l.b16 %v139
    %v179 = vunpack.c.l.b16 %v140
    %v180 = vunpack.c.l.b16 %v141
    %v181 = vunpack.c.l.b16 %v142
    %v182 = vunpack.c.l.b16 %v143
    %v183 = vunpack.c.l.b16 %v144
    %v184 = vunpack.c.l.b16 %v145
    %v185 = vunpack.c.l.b16 %v146
    %v186 = vunpack.c.l.b16 %v147
    %v187 = vunpack.c.l.b16 %v148
    %v188 = vunpack.c.l.b16 %v149
    %v189 = vunpack.c.l.b16 %v150
    %v190 = vunpack.c.l.b16 %v151
    %v191 = vunpack.c.l.b16 %v152
    %v192 = vunpack.c.l.b16 %v153
    %v193 = vunpack.c.l.b16 %v154
    %v194 = vpack.c.b16 %v179, %v178
    %v195 = vpack.c.b16 %v181, %v180
    %v196 = vpack.c.b16 %v183, %v182
    %v197 = vpack.c.b16 %v185, %v184
    %v198 = vpack.c.b16 %v187, %v186
    %v199 = vpack.c.b16 %v189, %v188
    %v200 = vpack.c.b16 %v191, %v190
    %v201 = vpack.c.b16 %v193, %v192
    %210 = vmatprep.subr.bf16.mxu0 0
    %211 = vmatpush1.bf16.msra.mxu0 %v194
    %212 = vmatprep.subr.bf16.mxu0 0
    %213 = vmatpush1.bf16.msra.mxu0 %v195
    %214 = vmatprep.subr.bf16.mxu0 0
    %215 = vmatpush1.bf16.msra.mxu0 %v196
    %216 = vmatprep.subr.bf16.mxu0 0
    %217 = vmatpush1.bf16.msra.mxu0 %v197
    %218 = vmatprep.subr.bf16.mxu0 0
    %219 = vmatpush1.bf16.msra.mxu0 %v198
    %220 = vmatprep.subr.bf16.mxu0 0
    %221 = vmatpush1.bf16.msra.mxu0 %v199
    %222 = vmatprep.subr.bf16.mxu0 0
    %223 = vmatpush1.bf16.msra.mxu0 %v200
    %224 = vmatprep.subr.bf16.mxu0 0
    %225 = vmatpush1.bf16.msra.mxu0 %v201
    %226 = vmatprep.subr.bf16.mxu0 0
    %227 = vmatpush1.bf16.msra.mxu0 0
    %228 = vmatprep.subr.bf16.mxu0 0
    %229 = vmatpush1.bf16.msra.mxu0 0
    %230 = vmatprep.subr.bf16.mxu0 0
    %231 = vmatpush1.bf16.msra.mxu0 0
    %232 = vmatprep.subr.bf16.mxu0 0
    %233 = vmatpush1.bf16.msra.mxu0 0
    %234 = vmatprep.subr.bf16.mxu0 0
    %235 = vmatpush1.bf16.msra.mxu0 0
    %236 = vmatprep.subr.bf16.mxu0 0
    %237 = vmatpush1.bf16.msra.mxu0 0
    %238 = vmatprep.subr.bf16.mxu0 0
    %239 = vmatpush1.bf16.msra.mxu0 0
    %240 = vmatprep.subr.bf16.mxu0 0
    %241 = vmatpush1.bf16.msra.mxu0 0
    %242 = vmatprep.mubr.bf16.mxu0 0
    %243 = vmatmul.mubr.bf16.gmra.mrb[0].mxu0 %v138
    %v244 = vpop.f32.mrb[0].mxu0
    %v245 = vadd.f32 %v160, %v244
    %v246 = vpop.f32.mrb[0].mxu0
    %v247 = vpop.f32.mrb[0].mxu0
    %v248 = vpop.f32.mrb[0].mxu0
    %249 = vdwg.mxu0
    %v250 = vmax.f32 %v245, 0.0
    %251 = vst [vmem:[#allocation8] sm:$0xff] %v250
    // Predicated region
    $region34: #{tpu_custom_call.1} parent=1 // pred_check
      _
    $region35: #{tpu_custom_call.1} parent=1 // pred_check_branch
      %253 = sbr.rel (0) target = $region37
    $region36: #{tpu_custom_call.1} parent=1 // pred_region
      %s255 = ssub.s32 128, 128
      %256 = vsyncadd [#allocation4], %s255
      %s258 = sshll.u32 [#allocation8], 4
      %s259 = int_to_ptr.vmem [resolvable:$true] %s258
      %261 = dma.vmem_to_hbm [thread:$0]  %s259, 128, %s5, [#allocation4]
    $region37: #{tpu_custom_call.1} parent=1 // pred_fallthru
      _
    // Predicated region
    $region38: #{tpu_custom_call.1} parent=1 // pred_check
      _
    $region39: #{tpu_custom_call.1} parent=1 // pred_check_branch
      %263 = sbr.rel (0) target = $region41
    $region40: #{tpu_custom_call.1} parent=1 // pred_region
      %264 = dma.done [#allocation4], 128
    $region41: #{tpu_custom_call.1} parent=1 // pred_fallthru
      _
    %265 = vsyncpa [#allocation3], 1
    %266 = vsyncpa [#allocation6], 1
    %267 = vsyncpa [#allocation4], 1

</llo_original>
